<compile_context>
chip_gen: v5e
topology: v5e:2x2
jax: 0.10.0
libtpu: 0.0.40
codegen_flags: <defaults>
</compile_context>

<pallas_src>
import jax
import jax.numpy as jnp
from jax import lax
from jax.experimental import pallas as pl
from jax.experimental.pallas import tpu as pltpu


def _bsl_kernel(img_ref, w_ref, txt_ref, scale_ref, margin_ref, out_ref, acc_ref):
    # img_ref   : [B, tk]    bf16 flattened-image K tile
    # w_ref     : [tk, D]    bf16 "encode_image" projection K tile
    # txt_ref   : [B, T, D]  f32 per-sample background text features
    # scale_ref : [B, 1]     f32 mask/T (0 if sample's category has no bg prompts)
    # margin_ref: [1, 1]     f32 margin scalar (SMEM)
    # out_ref   : [1, 1]     f32 scalar loss
    # acc_ref   : [B, D]     f32 accumulator scratch
    k = pl.program_id(0)

    @pl.when(k == 0)
    def _():
        acc_ref[...] = jnp.zeros_like(acc_ref)

    # encode_image projection: bf16 MXU matmul, f32 accumulation across K tiles.
    acc_ref[...] += jnp.dot(img_ref[...], w_ref[...],
                            preferred_element_type=jnp.float32)

    @pl.when(k == pl.num_programs(0) - 1)
    def _():
        feats = acc_ref[...]                                         # [B, D] f32
        txt = txt_ref[...]                                           # [B, T, D] f32

        # Cosine similarity, normalizing AFTER the reduction:
        #   x = <f, t> * rsqrt(|f|^2 * |t|^2)
        # broadcast-multiply + lane reduce (VPU + XLU); rsqrt goes to the EUP.
        s = jnp.sum(feats[:, None, :] * txt, axis=-1)                # [B, T]
        img_nrm2 = jnp.sum(feats * feats, axis=-1, keepdims=True)    # [B, 1]
        txt_nrm2 = jnp.sum(txt * txt, axis=-1)                       # [B, T]
        x = s * lax.rsqrt(img_nrm2 * txt_nrm2)                       # [B, T]

        # -log(1 - x + margin).mean() per sample; the 1/T and the bg-dict mask
        # are pre-folded into scale_ref on the host.
        one_plus_margin = 1.0 + margin_ref[0, 0]
        per_sample = jnp.sum(-jnp.log(one_plus_margin - x),
                             axis=-1, keepdims=True)                 # [B, 1]
        masked = per_sample * scale_ref[...]                         # [B, 1]
        out_ref[...] = jnp.sum(masked, axis=(0, 1), keepdims=True)   # [1, 1]


def background_suppression_loss(images_flat, w_img, text_feats, mask,
                                margin=0.0, block_k=None):
    B, P = images_flat.shape
    Pw, D = w_img.shape
    assert Pw == P
    T = text_feats.shape[1]

    # K-tile sizing: block_k must divide P and be a multiple of 128; keep the
    # double-buffered bf16 W tile well under the v7x (64 MiB VMEM) budget.
    if block_k is None:
        if P % 128 == 0:
            target = max(128, (8 * 1024 * 1024) // (2 * D))  # bf16 elems per W row-tile
            block_k = 128
            while block_k * 2 <= min(P, target) and P % (block_k * 2) == 0:
                block_k *= 2
        else:
            block_k = P  # full (untiled) contraction as a fallback
    assert P % block_k == 0 and (block_k % 128 == 0 or block_k == P)
    grid_k = P // block_k

    # bf16 MXU inputs (halves W's HBM traffic); accumulation stays f32.
    img_bf16 = images_flat.astype(jnp.bfloat16)
    w_bf16 = w_img.astype(jnp.bfloat16)
    txt_f32 = text_feats.astype(jnp.float32)
    scale = (mask.astype(jnp.float32) / float(T)).reshape(B, 1)  # mask and 1/T folded
    margin_arr = jnp.full((1, 1), margin, dtype=jnp.float32)

    grid_spec = pltpu.PrefetchScalarGridSpec(
        num_scalar_prefetch=0,
        grid=(grid_k,),
        in_specs=[
            pl.BlockSpec((B, block_k), lambda k: (0, k)),            # images
            pl.BlockSpec((block_k, D), lambda k: (k, 0)),            # W_img
            pl.BlockSpec((B, T, D), lambda k: (0, 0, 0)),            # text feats
            pl.BlockSpec((B, 1), lambda k: (0, 0)),                  # mask/T
            pl.BlockSpec(memory_space=pltpu.MemorySpace.SMEM),       # margin scalar
        ],
        out_specs=pl.BlockSpec((1, 1), lambda k: (0, 0)),
        scratch_shapes=[pltpu.VMEM((B, D), jnp.float32)],
    )
    out = pl.pallas_call(
        _bsl_kernel,
        out_shape=jax.ShapeDtypeStruct((1, 1), jnp.float32),
        grid_spec=grid_spec,
        compiler_params=pltpu.CompilerParams(
            dimension_semantics=("arbitrary",),       # K is a reduction axis
            vmem_limit_bytes=32 * 1024 * 1024,
        ),
    )(img_bf16, w_bf16, txt_f32, scale, margin_arr)
    return out[0, 0]


def _reference_loss(images_flat, w_img, text_feats, mask, margin=0.0):
    # Same bf16 MXU-input convention as the kernel, f32 accumulation.
    feats = jnp.dot(images_flat.astype(jnp.bfloat16), w_img.astype(jnp.bfloat16),
                    preferred_element_type=jnp.float32)
    img_n = feats / jnp.linalg.norm(feats, axis=-1, keepdims=True)
    txt_n = text_feats / jnp.linalg.norm(text_feats, axis=-1, keepdims=True)
    x = jnp.einsum('bd,btd->bt', img_n, txt_n)
    per = jnp.mean(-jnp.log(1.0 + margin - x), axis=-1)
    return jnp.sum(jnp.where(mask[:, 0] > 0, per, 0.0))


if __name__ == "__main__":
    B, C, H, W = 4, 3, 16, 16      # images: NCHW, like the PyTorch module
    D = 128                        # CLIP embed dim (synthetic)
    T = 8                          # number of background prompts per category
    P = C * H * W                  # 768 -> K grid of 3 tiles of 256
    margin = 0.0

    key = jax.random.PRNGKey(0)
    k_img, k_w, k_txt, k_dummy = jax.random.split(key, 4)

    # category_dict['voc'] and a synthetic background_dict['bg']
    voc = ['aeroplane', 'bicycle', 'bird', 'boat', 'bottle', 'bus', 'car',
           'cat', 'chair', 'cow', 'diningtable', 'dog', 'horse', 'motorbike',
           'person', 'pottedplant', 'sheep', 'sofa', 'train', 'tvmonitor']
    bg_categories = ['aeroplane', 'bird', 'bus', 'cat', 'dog', 'person']
    # synthetic "encode_text(clip.tokenize(bg_dict[cate]))" outputs, deterministic per category
    bg_dict = {
        cate: jax.random.normal(jax.random.fold_in(k_txt, voc.index(cate)), (T, D),
                                dtype=jnp.float32)
        for cate in bg_categories
    }

    # deterministic inputs
    images = jax.random.normal(k_img, (B, C, H, W), dtype=jnp.float32)   # NCHW
    w_img = jax.random.normal(k_w, (P, D), dtype=jnp.float32) * 0.05     # encode_image stand-in

    # labels: one-hot [B, num_classes]; some categories have bg prompts, some do not
    chosen = [0, 1, 7, 14]   # aeroplane (bg), bicycle (no bg), cat (bg), person (bg)
    labels = jnp.zeros((B, len(voc)), dtype=jnp.int32)
    for i, c in enumerate(chosen):
        labels = labels.at[i, c].set(1)

    # host glue: per-sample category lookup / bg_dict membership (Python dict logic)
    txt_rows, mask_rows = [], []
    for i in range(B):
        idx = int(jnp.argmax(labels[i]))            # nonzero(labels[i]).squeeze()
        cate = voc[idx]
        if cate in bg_dict:
            txt_rows.append(bg_dict[cate])
            mask_rows.append(1.0)
        else:
            txt_rows.append(jax.random.normal(jax.random.fold_in(k_dummy, i),
                                              (T, D), dtype=jnp.float32))
            mask_rows.append(0.0)
    text_feats = jnp.stack(txt_rows, axis=0)                              # [B, T, D]
    mask = jnp.asarray(mask_rows, dtype=jnp.float32).reshape(B, 1)        # [B, 1]

    images_flat = images.reshape(B, P)                                    # NCHW -> [B, C*H*W]

    loss = background_suppression_loss(images_flat, w_img, text_feats, mask, margin)
    loss = jax.block_until_ready(loss)

    ref = _reference_loss(images_flat, w_img, text_feats, mask, margin)
    assert jnp.allclose(loss, ref, rtol=1e-3, atol=1e-4), (loss, ref)

    print("KERNEL_OK")
</pallas_src>

<mosaic_0001>
module attributes {stable_mosaic.version = 11 : i64} {
  func.func @_bsl_kernel(%arg0: i32, %arg1: memref<4x256xbf16, #tpu.memory_space<vmem>>, %arg2: memref<256x128xbf16, #tpu.memory_space<vmem>>, %arg3: memref<4x8x128xf32, #tpu.memory_space<vmem>>, %arg4: memref<4x1xf32, #tpu.memory_space<vmem>>, %arg5: memref<1x1xf32, #tpu.memory_space<smem>>, %arg6: memref<1x1xf32, #tpu.memory_space<vmem>>, %arg7: memref<4x128xf32, #tpu.memory_space<vmem>>) attributes {dimension_semantics = [#tpu.dimension_semantics<arbitrary>], iteration_bounds = array<i64: 3>, scalar_prefetch = 0 : i64, scratch_operands = 1 : i64, tpu.core_type = #tpu.core_type<tc>, window_params = [{transform_indices = @transform_0, window_bounds = array<i64: 4, 256>}, {transform_indices = @transform_1, window_bounds = array<i64: 256, 128>}, {pipeline_mode = #tpu.pipeline_mode<synchronous>, transform_indices = @transform_2, window_bounds = array<i64: 4, 8, 128>}, {pipeline_mode = #tpu.pipeline_mode<synchronous>, transform_indices = @transform_3, window_bounds = array<i64: 4, 1>}, {transform_indices = @transform_4, window_bounds = array<i64: 1, 1>}, {pipeline_mode = #tpu.pipeline_mode<synchronous>, transform_indices = @transform_5, window_bounds = array<i64: 1, 1>}]} {
    %c0_i32 = arith.constant 0 : i32
    %0 = arith.cmpi eq, %arg0, %c0_i32 : i32
    %1 = arith.extui %0 : i1 to i32
    %c0_i32_0 = arith.constant 0 : i32
    %2 = arith.cmpi ne, %1, %c0_i32_0 : i32
    scf.if %2 {
      %cst_9 = arith.constant 0.000000e+00 : f32
      %12 = vector.broadcast %cst_9 : f32 to vector<4x128xf32>
      %c0_10 = arith.constant 0 : index
      %c0_11 = arith.constant 0 : index
      %13 = vector.load %arg7[%c0_10, %c0_11] : memref<4x128xf32, #tpu.memory_space<vmem>>, vector<4x128xf32>
      tpu.vector_store %arg7[%c0_10, %c0_11], %12 {strides = array<i32>} : memref<4x128xf32, #tpu.memory_space<vmem>>, vector<4x128xf32>,
    } else {
    }
    %c0 = arith.constant 0 : index
    %c0_1 = arith.constant 0 : index
    %3 = vector.load %arg7[%c0, %c0_1] : memref<4x128xf32, #tpu.memory_space<vmem>>, vector<4x128xf32>
    %c0_2 = arith.constant 0 : index
    %c0_3 = arith.constant 0 : index
    %4 = vector.load %arg1[%c0_2, %c0_3] : memref<4x256xbf16, #tpu.memory_space<vmem>>, vector<4x256xbf16>
    %c0_4 = arith.constant 0 : index
    %c0_5 = arith.constant 0 : index
    %5 = vector.load %arg2[%c0_4, %c0_5] : memref<256x128xbf16, #tpu.memory_space<vmem>>, vector<256x128xbf16>
    %cst = arith.constant dense<0.000000e+00> : vector<4x128xf32>
    %6 = tpu.matmul %4, %5, %cst {dimension_numbers = #tpu.dot_dimension_numbers<[1], [0], [0], [1], [0, 0, 1, 1], [], []>} : vector<4x256xbf16>, vector<256x128xbf16>, vector<4x128xf32> -> vector<4x128xf32>
    %7 = arith.addf %3, %6 : vector<4x128xf32>
    %c0_6 = arith.constant 0 : index
    %c0_7 = arith.constant 0 : index
    %8 = vector.load %arg7[%c0_6, %c0_7] : memref<4x128xf32, #tpu.memory_space<vmem>>, vector<4x128xf32>
    tpu.vector_store %arg7[%c0_6, %c0_7], %7 {strides = array<i32>} : memref<4x128xf32, #tpu.memory_space<vmem>>, vector<4x128xf32>,
    %c2_i32 = arith.constant 2 : i32
    %9 = arith.cmpi eq, %arg0, %c2_i32 : i32
    %10 = arith.extui %9 : i1 to i32
    %c0_i32_8 = arith.constant 0 : i32
    %11 = arith.cmpi ne, %10, %c0_i32_8 : i32
    scf.if %11 {
      %c0_9 = arith.constant 0 : index
      %c0_10 = arith.constant 0 : index
      %12 = vector.load %arg7[%c0_9, %c0_10] : memref<4x128xf32, #tpu.memory_space<vmem>>, vector<4x128xf32>
      %c0_11 = arith.constant 0 : index
      %c0_12 = arith.constant 0 : index
      %c0_13 = arith.constant 0 : index
      %13 = vector.load %arg3[%c0_11, %c0_12, %c0_13] : memref<4x8x128xf32, #tpu.memory_space<vmem>>, vector<4x8x128xf32>
      %14 = vector.shape_cast %12 : vector<4x128xf32> to vector<4x1x128xf32>
      %15 = vector.broadcast %14 : vector<4x1x128xf32> to vector<4x8x128xf32>
      %16 = arith.mulf %15, %13 : vector<4x8x128xf32>
      %cst_14 = arith.constant dense<0.000000e+00> : vector<4x8xf32>
      %17 = vector.multi_reduction <add>, %16, %cst_14 [2] : vector<4x8x128xf32> to vector<4x8xf32>
      %18 = arith.mulf %12, %12 : vector<4x128xf32>
      %cst_15 = arith.constant dense<0.000000e+00> : vector<4xf32>
      %19 = vector.multi_reduction <add>, %18, %cst_15 [1] : vector<4x128xf32> to vector<4xf32>
      %20 = vector.shape_cast %19 : vector<4xf32> to vector<4x1xf32>
      %21 = arith.mulf %13, %13 : vector<4x8x128xf32>
      %cst_16 = arith.constant dense<0.000000e+00> : vector<4x8xf32>
      %22 = vector.multi_reduction <add>, %21, %cst_16 [2] : vector<4x8x128xf32> to vector<4x8xf32>
      %23 = vector.broadcast %20 : vector<4x1xf32> to vector<4x8xf32>
      %24 = arith.mulf %23, %22 : vector<4x8xf32>
      %25 = math.rsqrt %24 : vector<4x8xf32>
      %26 = arith.mulf %17, %25 : vector<4x8xf32>
      %c0_17 = arith.constant 0 : index
      %c0_18 = arith.constant 0 : index
      %27 = memref.load %arg5[%c0_17, %c0_18] : memref<1x1xf32, #tpu.memory_space<smem>>
      %cst_19 = arith.constant 1.000000e+00 : f32
      %28 = arith.addf %cst_19, %27 : f32
      %29 = vector.broadcast %28 : f32 to vector<4x8xf32>
      %30 = arith.subf %29, %26 : vector<4x8xf32>
      %31 = math.log %30 : vector<4x8xf32>
      %cst_20 = arith.constant 0.000000e+00 : f32
      %32 = vector.broadcast %cst_20 : f32 to vector<4x8xf32>
      %33 = arith.subf %32, %31 : vector<4x8xf32>
      %cst_21 = arith.constant dense<0.000000e+00> : vector<4xf32>
      %34 = vector.multi_reduction <add>, %33, %cst_21 [1] : vector<4x8xf32> to vector<4xf32>
      %35 = vector.shape_cast %34 : vector<4xf32> to vector<4x1xf32>
      %c0_22 = arith.constant 0 : index
      %c0_23 = arith.constant 0 : index
      %36 = vector.load %arg4[%c0_22, %c0_23] : memref<4x1xf32, #tpu.memory_space<vmem>>, vector<4x1xf32>
      %37 = arith.mulf %35, %36 : vector<4x1xf32>
      %38 = vector.shape_cast %37 : vector<4x1xf32> to vector<1x4x1xf32>
      %cst_24 = arith.constant dense<0.000000e+00> : vector<1xf32>
      %39 = vector.multi_reduction <add>, %38, %cst_24 [1, 2] : vector<1x4x1xf32> to vector<1xf32>
      %40 = vector.shape_cast %39 : vector<1xf32> to vector<1x1x1xf32>
      %41 = vector.extract %40[0, 0, 0] : f32 from vector<1x1x1xf32>
      %42 = vector.broadcast %41 : f32 to vector<1x1xf32>
      %c0_25 = arith.constant 0 : index
      %c0_26 = arith.constant 0 : index
      %43 = vector.load %arg6[%c0_25, %c0_26] : memref<1x1xf32, #tpu.memory_space<vmem>>, vector<1x1xf32>
      tpu.vector_store %arg6[%c0_25, %c0_26], %42 {strides = array<i32>} : memref<1x1xf32, #tpu.memory_space<vmem>>, vector<1x1xf32>,
    } else {
    }
    return
  }
  func.func @transform_0(%arg0: i32) -> (i32, i32) {
    %c0_i32 = arith.constant 0 : i32
    %c0_i32_0 = arith.constant 0 : i32
    return %c0_i32, %arg0 : i32, i32
  }
  func.func @transform_1(%arg0: i32) -> (i32, i32) {
    %c0_i32 = arith.constant 0 : i32
    %c0_i32_0 = arith.constant 0 : i32
    return %arg0, %c0_i32 : i32, i32
  }
  func.func @transform_2(%arg0: i32) -> (i32, i32, i32) {
    %c0_i32 = arith.constant 0 : i32
    %c0_i32_0 = arith.constant 0 : i32
    %c0_i32_1 = arith.constant 0 : i32
    %c0_i32_2 = arith.constant 0 : i32
    return %c0_i32, %c0_i32_0, %c0_i32_1 : i32, i32, i32
  }
  func.func @transform_3(%arg0: i32) -> (i32, i32) {
    %c0_i32 = arith.constant 0 : i32
    %c0_i32_0 = arith.constant 0 : i32
    %c0_i32_1 = arith.constant 0 : i32
    return %c0_i32, %c0_i32_0 : i32, i32
  }
  func.func @transform_4(%arg0: i32) -> (i32, i32) {
    %c0_i32 = arith.constant 0 : i32
    %c0_i32_0 = arith.constant 0 : i32
    %c0_i32_1 = arith.constant 0 : i32
    return %c0_i32, %c0_i32_0 : i32, i32
  }
  func.func @transform_5(%arg0: i32) -> (i32, i32) {
    %c0_i32 = arith.constant 0 : i32
    %c0_i32_0 = arith.constant 0 : i32
    %c0_i32_1 = arith.constant 0 : i32
    return %c0_i32, %c0_i32_0 : i32, i32
  }
}

</mosaic_0001>

<llo_original>
// kernel: tpu_custom_call.1
$region0: #{tpu_custom_call.1}
  #allocation0 [shape = 'u32[]', space=smem, size = 0x4, offset = 0x4, fixed_abs, tag = 'smem constant byte address 0x4 - core index']
  #allocation1 [shape = 'u32[72,128]{1,0:T(1,128)}', space=vmem, size = 0x9000, scoped, tag = 'internal scratch']
  #allocation2 [shape = 'f32[4,128]{1,0:T(4,128)}', space=vmem, size = 0x800, scoped, tag = 'scratch operand']
  #allocation3 [shape = 'f32[1,1]{1,0:T(1,128)S(6)}', space=smem, size = 0x200, scoped, tag = 'scoped memory for tpu_custom_call.1']
  %s0 = inlined_call_operand.hbm [shape: bf16[4,768], index: 0, kind: input, shape index: {}]
  %s1 = inlined_call_operand.hbm [shape: bf16[768,128], index: 1, kind: input, shape index: {}]
  %s2 = inlined_call_operand.hbm [shape: f32[4,8,128], index: 2, kind: input, shape index: {}]
  %s3 = inlined_call_operand.vmem [shape: f32[4,1], index: 3, kind: input, shape index: {}]
  %s4 = inlined_call_operand.<no memory space> [shape: f32[1,1], index: 4, kind: input, shape index: {}]
  %s5 = inlined_call_operand.hbm [shape: f32[1,1], index: 5, kind: output, shape index: {}]
  %s6 = sld [smem:[#allocation0]]
  $region73: #{tpu_custom_call.1} parent=0
    _
  %s8 = ssub.s32 1, %s6
  %s9 = scalar_select 0, %s8, %s6
  %10 = sst [smem:[#allocation3]] %s4
  $region1: #{tpu_custom_call.1} parent=0
    #allocation4 [shape = 'u8[4096]{0}', space=vmem, size = 0x1000, scoped, tag = 'input window, operand 0']
    #allocation5 [shape = 's32[2]{0}', space=sflag, size = 0x8, scoped, tag = 'scoped memory for tpu_custom_call.1']
    #allocation6 [shape = 's32[2]{0}', space=sflag, size = 0x8, scoped, tag = 'scoped memory for tpu_custom_call.1']
    #allocation7 [shape = 'u8[131072]{0}', space=vmem, size = 0x20000, scoped, tag = 'input window, operand 1']
    #allocation8 [shape = 's32[2]{0}', space=sflag, size = 0x8, scoped, tag = 'scoped memory for tpu_custom_call.1']
    #allocation9 [shape = 'u8[16384]{0}', space=vmem, size = 0x4000, scoped, tag = 'input window, operand 2, single buffered']
    #allocation10 [shape = 'u8[512]{0}', space=vmem, size = 0x400, scoped, tag = 'output window, operand 0, single buffered']
    %11 = vsyncpa [#allocation5], 0
    %s12 = scalar_lea.sflag [#allocation5], 1
    %13 = vsyncpa %s12, 0
    %14 = vsyncpa [#allocation8], 0
    %s15 = scalar_lea.sflag [#allocation8], 1
    %16 = vsyncpa %s15, 0
    %17 = vsyncpa [#allocation6], 0
    loop: start=0, step=1, limit=5
    $region2: #{tpu_custom_call.1} parent=1 // loop_pre_header
      _
    $region3: #{tpu_custom_call.1} parent=1 // loop_header
      %s19 = sphi 0, %s23
      %p20 = scmp.ge.s32.totalorder %s19, 5
      %s29 = sphi 0, %s31
      %s32 = sphi 0, %s29
      %s33 = sphi 0, %s32
      %s49 = sphi 0, %s33
      %s55 = sphi 0, %s57
      %s58 = sphi 0, %s55
      %s59 = sphi 0, %s58
      %s75 = sphi 0, %s59
      %s79 = sphi 0, %s79
      %s81 = sphi 0, %s79
      %s82 = sphi 0, %s81
      %s96 = sphi 0, %s82
      %s100 = sphi 0, %s100
      %s102 = sphi 0, %s100
      %s103 = sphi 0, %s102
      %s117 = sphi 0, %s103
      %s121 = sphi 0, %s121
      %s123 = sphi 0, %s121
      %s124 = sphi 0, %s123
      %s138 = sphi 0, %s124
      %s142 = sphi 0, %s142
      %s144 = sphi 0, %s142
      %s145 = sphi 0, %s144
      %s159 = sphi 0, %s145
    $region4: #{tpu_custom_call.1} parent=1 // loop_header_branch
      %22 = sbr.rel (%p20) target = $region8
    $region5: #{tpu_custom_call.1} parent=1 // loop_body
      %s24 = ssub.s32 %s19, 1
      %s25 = ssub.s32 %s19, 2
      %s26 = sadd.s32 %s19, 1
      %s27 = ssub.s32 %s19, %s26
      %p28 = scmp.eq.s32.totalorder %s27, 0
      %s30 = sadd.s32 %s29, 1
      %s31 = scalar_select %p28, %s29, %s30
      %p34 = pneg %p28
      %p35 = scmp.eq.s32.totalorder %s19, 2
      %p36 = por %p34, %p35
      %p37 = scmp.ne.s32.totalorder %s29, %s32
      %p38 = scmp.eq.s32.totalorder %s19, 0
      %p39 = por %p37, %p38
      %p40 = scmp.ne.s32.totalorder %s29, %s32
      %p41 = scmp.eq.s32.totalorder %s24, 2
      %p42 = por %p40, %p41
      %p43 = scmp.ne.s32.totalorder %s32, %s33
      %p44 = scmp.eq.s32.totalorder %s24, 0
      %p45 = por %p43, %p44
      %p46 = scmp.ne.s32.totalorder %s32, %s33
      %p47 = scmp.eq.s32.totalorder %s25, 2
      %p48 = por %p46, %p47
      %p50 = scmp.ne.s32.totalorder %s33, %s49
      %p51 = scmp.eq.s32.totalorder %s25, 0
      %p52 = por %p50, %p51
      %s53 = ssub.s32 %s19, %s26
      %p54 = scmp.eq.s32.totalorder %s53, 0
      %s56 = sadd.s32 %s55, 1
      %s57 = scalar_select %p54, %s55, %s56
      %p60 = pneg %p54
      %p61 = scmp.eq.s32.totalorder %s19, 2
      %p62 = por %p60, %p61
      %p63 = scmp.ne.s32.totalorder %s55, %s58
      %p64 = scmp.eq.s32.totalorder %s19, 0
      %p65 = por %p63, %p64
      %p66 = scmp.ne.s32.totalorder %s55, %s58
      %p67 = scmp.eq.s32.totalorder %s24, 2
      %p68 = por %p66, %p67
      %p69 = scmp.ne.s32.totalorder %s58, %s59
      %p70 = scmp.eq.s32.totalorder %s24, 0
      %p71 = por %p69, %p70
      %p72 = scmp.ne.s32.totalorder %s58, %s59
      %p73 = scmp.eq.s32.totalorder %s25, 2
      %p74 = por %p72, %p73
      %p76 = scmp.ne.s32.totalorder %s59, %s75
      %p77 = scmp.eq.s32.totalorder %s25, 0
      %p78 = por %p76, %p77
      %s80 = sadd.s32 %s79, 1
      %p83 = scmp.eq.s32.totalorder %s19, 2
      %p84 = scmp.ne.s32.totalorder %s79, %s81
      %p85 = scmp.eq.s32.totalorder %s19, 0
      %p86 = por %p84, %p85
      %p87 = scmp.ne.s32.totalorder %s79, %s81
      %p88 = scmp.eq.s32.totalorder %s24, 2
      %p89 = por %p87, %p88
      %p90 = scmp.ne.s32.totalorder %s81, %s82
      %p91 = scmp.eq.s32.totalorder %s24, 0
      %p92 = por %p90, %p91
      %p93 = scmp.ne.s32.totalorder %s81, %s82
      %p94 = scmp.eq.s32.totalorder %s25, 2
      %p95 = por %p93, %p94
      %p97 = scmp.ne.s32.totalorder %s82, %s96
      %p98 = scmp.eq.s32.totalorder %s25, 0
      %p99 = por %p97, %p98
      %s101 = sadd.s32 %s100, 1
      %p104 = scmp.eq.s32.totalorder %s19, 2
      %p105 = scmp.ne.s32.totalorder %s100, %s102
      %p106 = scmp.eq.s32.totalorder %s19, 0
      %p107 = por %p105, %p106
      %p108 = scmp.ne.s32.totalorder %s100, %s102
      %p109 = scmp.eq.s32.totalorder %s24, 2
      %p110 = por %p108, %p109
      %p111 = scmp.ne.s32.totalorder %s102, %s103
      %p112 = scmp.eq.s32.totalorder %s24, 0
      %p113 = por %p111, %p112
      %p114 = scmp.ne.s32.totalorder %s102, %s103
      %p115 = scmp.eq.s32.totalorder %s25, 2
      %p116 = por %p114, %p115
      %p118 = scmp.ne.s32.totalorder %s103, %s117
      %p119 = scmp.eq.s32.totalorder %s25, 0
      %p120 = por %p118, %p119
      %s122 = sadd.s32 %s121, 1
      %p125 = scmp.eq.s32.totalorder %s19, 2
      %p126 = scmp.ne.s32.totalorder %s121, %s123
      %p127 = scmp.eq.s32.totalorder %s19, 0
      %p128 = por %p126, %p127
      %p129 = scmp.ne.s32.totalorder %s121, %s123
      %p130 = scmp.eq.s32.totalorder %s24, 2
      %p131 = por %p129, %p130
      %p132 = scmp.ne.s32.totalorder %s123, %s124
      %p133 = scmp.eq.s32.totalorder %s24, 0
      %p134 = por %p132, %p133
      %p135 = scmp.ne.s32.totalorder %s123, %s124
      %p136 = scmp.eq.s32.totalorder %s25, 2
      %p137 = por %p135, %p136
      %p139 = scmp.ne.s32.totalorder %s124, %s138
      %p140 = scmp.eq.s32.totalorder %s25, 0
      %p141 = por %p139, %p140
      %s143 = sadd.s32 %s142, 1
      %p146 = scmp.eq.s32.totalorder %s19, 2
      %p147 = scmp.ne.s32.totalorder %s142, %s144
      %p148 = scmp.eq.s32.totalorder %s19, 0
      %p149 = por %p147, %p148
      %p150 = scmp.ne.s32.totalorder %s142, %s144
      %p151 = scmp.eq.s32.totalorder %s24, 2
      %p152 = por %p150, %p151
      %p153 = scmp.ne.s32.totalorder %s144, %s145
      %p154 = scmp.eq.s32.totalorder %s24, 0
      %p155 = por %p153, %p154
      %p156 = scmp.ne.s32.totalorder %s144, %s145
      %p157 = scmp.eq.s32.totalorder %s25, 2
      %p158 = por %p156, %p157
      %p160 = scmp.ne.s32.totalorder %s145, %s159
      %p161 = scmp.eq.s32.totalorder %s25, 0
      %p162 = por %p160, %p161
      %p163 = scmp.le.s32.totalorder 1, %s19
      %p164 = scmp.lt.s32.totalorder %s19, 4
      %p165 = pnand %p163, %p164
      %p166 = pneg %p165
      // Predicated region
      $region9: #{tpu_custom_call.1} parent=5 // pred_check
        _
      $region10: #{tpu_custom_call.1} parent=5 // pred_check_branch
        %168 = sbr.rel (%p165) target = $region12
      $region11: #{tpu_custom_call.1} parent=5 // pred_region
        %s169 = ssub.s32 %s19, 1
        // Predicated region
        $region13: #{tpu_custom_call.1} parent=11 // pred_check
          %p170 = pneg %p92
        $region14: #{tpu_custom_call.1} parent=11 // pred_check_branch
          %172 = sbr.rel (%p170) target = $region16
        $region15: #{tpu_custom_call.1} parent=11 // pred_region
          %174 = vsyncadd [#allocation8], 0
          %s175 = sshll.u32 %s2, 4
          %s176 = int_to_ptr.hbm [resolvable:$true] %s175
          %s177 = sshll.u32 [#allocation9], 4
          %s178 = int_to_ptr.vmem [resolvable:$true] %s177
          %183 = dma.hbm_to_vmem [thread:$0]  %s176, 512, %s178, [#allocation8], 128, 128, 8
        $region16: #{tpu_custom_call.1} parent=11 // pred_fallthru
          _
        // Predicated region
        $region17: #{tpu_custom_call.1} parent=11 // pred_check
          %p184 = pneg %p113
        $region18: #{tpu_custom_call.1} parent=11 // pred_check_branch
          %186 = sbr.rel (%p184) target = $region20
        $region19: #{tpu_custom_call.1} parent=11 // pred_region
          _
        $region20: #{tpu_custom_call.1} parent=11 // pred_fallthru
          _
        // Predicated region
        $region21: #{tpu_custom_call.1} parent=11 // pred_check
          %p187 = pneg %p134
        $region22: #{tpu_custom_call.1} parent=11 // pred_check_branch
          %189 = sbr.rel (%p187) target = $region24
        $region23: #{tpu_custom_call.1} parent=11 // pred_region
          _
        $region24: #{tpu_custom_call.1} parent=11 // pred_fallthru
          _
      $region12: #{tpu_custom_call.1} parent=5 // pred_fallthru
        _
      %p190 = scmp.lt.s32.totalorder %s19, 3
      // Predicated region
      $region25: #{tpu_custom_call.1} parent=5 // pred_check
        %p191 = pneg %p190
      $region26: #{tpu_custom_call.1} parent=5 // pred_check_branch
        %193 = sbr.rel (%p191) target = $region28
      $region27: #{tpu_custom_call.1} parent=5 // pred_region
        // Predicated region
        $region29: #{tpu_custom_call.1} parent=27 // pred_check
          %p194 = pneg %p39
        $region30: #{tpu_custom_call.1} parent=27 // pred_check_branch
          %196 = sbr.rel (%p194) target = $region32
        $region31: #{tpu_custom_call.1} parent=27 // pred_region
          %s197 = sand.u32 %s29, 1
          %s198 = scalar_lea.sflag [#allocation5], %s197
          %s199 = sand.u32 %s29, 1
          %s200 = smul.addr %s199, 4
          %s201 = scalar_lea.vmem [#allocation4], %s200
          %s202 = smul.u32 2, %s19
          %204 = vsyncadd %s198, 0
          %s205 = smul.addr %s202, 2
          %s206 = scalar_lea.hbm %s0, %s205
          %s208 = sshll.u32 %s206, 4
          %s209 = int_to_ptr.hbm [resolvable:$true] %s208
          %s210 = sshll.u32 %s201, 4
          %s211 = int_to_ptr.vmem [resolvable:$true] %s210
          %213 = dma.hbm_to_vmem [thread:$0]  %s209, 64, %s211, %s198
        $region32: #{tpu_custom_call.1} parent=27 // pred_fallthru
          _
        // Predicated region
        $region33: #{tpu_custom_call.1} parent=27 // pred_check
          %p214 = pneg %p65
        $region34: #{tpu_custom_call.1} parent=27 // pred_check_branch
          %216 = sbr.rel (%p214) target = $region36
        $region35: #{tpu_custom_call.1} parent=27 // pred_region
          %s217 = sand.u32 %s19, 1
          %s218 = scalar_lea.sflag [#allocation8], %s217
          %s219 = sand.u32 %s55, 1
          %s220 = smul.addr %s219, 128
          %s221 = scalar_lea.vmem [#allocation7], %s220
          %s222 = smul.u32 32, %s19
          %224 = vsyncadd %s218, 0
          %s225 = smul.addr %s222, 4
          %s226 = scalar_lea.hbm %s1, %s225
          %s227 = sshll.u32 %s226, 4
          %s228 = int_to_ptr.hbm [resolvable:$true] %s227
          %s229 = sshll.u32 %s221, 4
          %s230 = int_to_ptr.vmem [resolvable:$true] %s229
          %235 = dma.hbm_to_vmem [thread:$0]  %s228, 2048, %s230, %s218, 64, 64, 4
        $region36: #{tpu_custom_call.1} parent=27 // pred_fallthru
          _
      $region28: #{tpu_custom_call.1} parent=5 // pred_fallthru
        _
      %p236 = scmp.le.s32.totalorder 1, %s19
      %p237 = scmp.lt.s32.totalorder %s19, 4
      %p238 = pnand %p236, %p237
      %p239 = pneg %p238
      // Predicated region
      $region37: #{tpu_custom_call.1} parent=5 // pred_check
        _
      $region38: #{tpu_custom_call.1} parent=5 // pred_check_branch
        %241 = sbr.rel (%p238) target = $region40
      $region39: #{tpu_custom_call.1} parent=5 // pred_region
        %s242 = ssub.s32 %s19, 1
        %s243 = sand.u32 %s32, 1
        %s244 = scalar_lea.sflag [#allocation5], %s243
        %s245 = sand.u32 %s32, 1
        %s246 = smul.addr %s245, 4
        %s247 = scalar_lea.vmem [#allocation4], %s246
        // Predicated region
        $region41: #{tpu_custom_call.1} parent=39 // pred_check
          %p248 = pneg %p45
        $region42: #{tpu_custom_call.1} parent=39 // pred_check_branch
          %250 = sbr.rel (%p248) target = $region44
        $region43: #{tpu_custom_call.1} parent=39 // pred_region
          %252 = dma.done %s244, 64
        $region44: #{tpu_custom_call.1} parent=39 // pred_fallthru
          _
        %s253 = sand.u32 %s24, 1
        %s254 = scalar_lea.sflag [#allocation8], %s253
        %s255 = sand.u32 %s58, 1
        %s256 = smul.addr %s255, 128
        %s257 = scalar_lea.vmem [#allocation7], %s256
        // Predicated region
        $region45: #{tpu_custom_call.1} parent=39 // pred_check
          %p258 = pneg %p71
        $region46: #{tpu_custom_call.1} parent=39 // pred_check_branch
          %260 = sbr.rel (%p258) target = $region48
        $region47: #{tpu_custom_call.1} parent=39 // pred_region
          %262 = dma.done %s254, 2048
        $region48: #{tpu_custom_call.1} parent=39 // pred_fallthru
          _
        // Predicated region
        $region49: #{tpu_custom_call.1} parent=39 // pred_check
          %p263 = pneg %p92
        $region50: #{tpu_custom_call.1} parent=39 // pred_check_branch
          %265 = sbr.rel (%p263) target = $region52
        $region51: #{tpu_custom_call.1} parent=39 // pred_region
          %267 = dma.done [#allocation8], 512
        $region52: #{tpu_custom_call.1} parent=39 // pred_fallthru
          _
        %s268 = sand.u32 %s32, 1
        %s269 = scalar_lea.sflag [#allocation5], %s268
        %s270 = sand.u32 %s32, 1
        %s271 = smul.addr %s270, 4
        %s272 = scalar_lea.vmem [#allocation4], %s271
        %p273 = pneg %p45
        %p274 = pneg %p42
        %s275 = sand.u32 %s24, 1
        %s276 = scalar_lea.sflag [#allocation8], %s275
        %s277 = sand.u32 %s58, 1
        %s278 = smul.addr %s277, 128
        %s279 = scalar_lea.vmem [#allocation7], %s278
        %p280 = pneg %p71
        %p281 = pneg %p68
        %p282 = pneg %p92
        %p283 = pneg %p89
        %p284 = pneg %p113
        %p285 = pneg %p110
        %p286 = pneg %p134
        %p287 = pneg %p131
        %p288 = pneg %p155
        %p289 = pneg %p152
        %s290 = smul.u32 2, %s24
        %s291 = smul.u32 32, %s24
        %p292 = scmp.eq.s32.totalorder %s24, 0
        // Predicated region
        $region53: #{tpu_custom_call.1} parent=39 // pred_check
          %p293 = pneg %p292
        $region54: #{tpu_custom_call.1} parent=39 // pred_check_branch
          %295 = sbr.rel (%p293) target = $region56
        $region55: #{tpu_custom_call.1} parent=39 // pred_region
          %296 = vst [vmem:[#allocation2] sm:$0xf] 0.0
        $region56: #{tpu_custom_call.1} parent=39 // pred_fallthru
          _
        %v297 = vld [vmem:[#allocation2] sm:$0xf]
        %v298 = vld [vmem:[%s247] sm:$0xf]
        %v299 = vld [vmem:[%s257] sm:$0xf]
        %v300 = vld [vmem:[%s257 + $0x4] sm:$0xf]
        %v301 = vld [vmem:[%s257 + $0x8] sm:$0xf]
        %v302 = vld [vmem:[%s257 + $0xc] sm:$0xf]
        %v303 = vld [vmem:[%s257 + $0x10] sm:$0xf]
        %v304 = vld [vmem:[%s257 + $0x14] sm:$0xf]
        %v305 = vld [vmem:[%s257 + $0x18] sm:$0xf]
        %v306 = vld [vmem:[%s257 + $0x1c] sm:$0xf]
        %v307 = vld [vmem:[%s257 + $0x20] sm:$0xf]
        %v308 = vld [vmem:[%s257 + $0x24] sm:$0xf]
        %v309 = vld [vmem:[%s257 + $0x28] sm:$0xf]
        %v310 = vld [vmem:[%s257 + $0x2c] sm:$0xf]
        %v311 = vld [vmem:[%s257 + $0x30] sm:$0xf]
        %v312 = vld [vmem:[%s257 + $0x34] sm:$0xf]
        %v313 = vld [vmem:[%s257 + $0x38] sm:$0xf]
        %v314 = vld [vmem:[%s257 + $0x3c] sm:$0xf]
        %v315 = vld [vmem:[%s257 + $0x40] sm:$0xf]
        %v316 = vld [vmem:[%s257 + $0x44] sm:$0xf]
        %v317 = vld [vmem:[%s257 + $0x48] sm:$0xf]
        %v318 = vld [vmem:[%s257 + $0x4c] sm:$0xf]
        %v319 = vld [vmem:[%s257 + $0x50] sm:$0xf]
        %v320 = vld [vmem:[%s257 + $0x54] sm:$0xf]
        %v321 = vld [vmem:[%s257 + $0x58] sm:$0xf]
        %v322 = vld [vmem:[%s257 + $0x5c] sm:$0xf]
        %v323 = vld [vmem:[%s257 + $0x60] sm:$0xf]
        %v324 = vld [vmem:[%s257 + $0x64] sm:$0xf]
        %v325 = vld [vmem:[%s257 + $0x68] sm:$0xf]
        %v326 = vld [vmem:[%s257 + $0x6c] sm:$0xf]
        %v327 = vld [vmem:[%s257 + $0x70] sm:$0xf]
        %v328 = vld [vmem:[%s257 + $0x74] sm:$0xf]
        %v329 = vld [vmem:[%s257 + $0x78] sm:$0xf]
        %v330 = vld [vmem:[%s257 + $0x7c] sm:$0xf]
        %332 = vst [vmem:[#allocation1] ss:$4 sm:$0xff] %v298
        %v333 = vld.sshfl [vmem:[#allocation1] sm:$0xff pattern:$0x73625140]
        %v334 = vld.sshfl [vmem:[#allocation1 + $0x8] sm:$0xff pattern:$0x73625140]
        %v369 = vunpack.c.l.b16 %v299
        %v370 = vunpack.c.l.b16 %v300
        %v371 = vunpack.c.l.b16 %v301
        %v372 = vunpack.c.l.b16 %v302
        %v373 = vunpack.c.l.b16 %v303
        %v374 = vunpack.c.l.b16 %v304
        %v375 = vunpack.c.l.b16 %v305
        %v376 = vunpack.c.l.b16 %v306
        %v377 = vunpack.c.l.b16 %v307
        %v378 = vunpack.c.l.b16 %v308
        %v379 = vunpack.c.l.b16 %v309
        %v380 = vunpack.c.l.b16 %v310
        %v381 = vunpack.c.l.b16 %v311
        %v382 = vunpack.c.l.b16 %v312
        %v383 = vunpack.c.l.b16 %v313
        %v384 = vunpack.c.l.b16 %v314
        %v385 = vunpack.c.l.b16 %v315
        %v386 = vunpack.c.l.b16 %v316
        %v387 = vunpack.c.l.b16 %v317
        %v388 = vunpack.c.l.b16 %v318
        %v389 = vunpack.c.l.b16 %v319
        %v390 = vunpack.c.l.b16 %v320
        %v391 = vunpack.c.l.b16 %v321
        %v392 = vunpack.c.l.b16 %v322
        %v393 = vunpack.c.l.b16 %v323
        %v394 = vunpack.c.l.b16 %v324
        %v395 = vunpack.c.l.b16 %v325
        %v396 = vunpack.c.l.b16 %v326
        %v397 = vunpack.c.l.b16 %v327
        %v398 = vunpack.c.l.b16 %v328
        %v399 = vunpack.c.l.b16 %v329
        %v400 = vunpack.c.l.b16 %v330
        %v401 = vpack.c.b16 %v370, %v369
        %v402 = vpack.c.b16 %v372, %v371
        %v403 = vpack.c.b16 %v374, %v373
        %v404 = vpack.c.b16 %v376, %v375
        %v405 = vpack.c.b16 %v378, %v377
        %v406 = vpack.c.b16 %v380, %v379
        %v407 = vpack.c.b16 %v382, %v381
        %v408 = vpack.c.b16 %v384, %v383
        %v409 = vpack.c.b16 %v386, %v385
        %v410 = vpack.c.b16 %v388, %v387
        %v411 = vpack.c.b16 %v390, %v389
        %v412 = vpack.c.b16 %v392, %v391
        %v413 = vpack.c.b16 %v394, %v393
        %v414 = vpack.c.b16 %v396, %v395
        %v415 = vpack.c.b16 %v398, %v397
        %v416 = vpack.c.b16 %v400, %v399
        %433 = vmatpush.bf16.msra.mxu0 %v408
        %434 = vmatpush.bf16.msra.mxu0 %v407
        %435 = vmatpush.bf16.msra.mxu0 %v406
        %436 = vmatpush.bf16.msra.mxu0 %v405
        %437 = vmatpush.bf16.msra.mxu0 %v404
        %438 = vmatpush.bf16.msra.mxu0 %v403
        %439 = vmatpush.bf16.msra.mxu0 %v402
        %440 = vmatpush.bf16.msra.mxu0 %v401
        %441 = vmatmul.bf16.gmra.mxu0 %v333
        %v442 = vpop.f32.mrf.mxu0
        %v443 = vadd.f32 0.0, %v442
        %v444 = vpop.f32.mrf.mxu0
        %445 = vdwg.mxu0
        %446 = vmatpush.bf16.msra.mxu0 %v416
        %447 = vmatpush.bf16.msra.mxu0 %v415
        %448 = vmatpush.bf16.msra.mxu0 %v414
        %449 = vmatpush.bf16.msra.mxu0 %v413
        %450 = vmatpush.bf16.msra.mxu0 %v412
        %451 = vmatpush.bf16.msra.mxu0 %v411
        %452 = vmatpush.bf16.msra.mxu0 %v410
        %453 = vmatpush.bf16.msra.mxu0 %v409
        %454 = vmatmul.bf16.gmra.mxu0 %v334
        %v455 = vpop.f32.mrf.mxu0
        %v456 = vadd.f32 %v443, %v455
        %v457 = vpop.f32.mrf.mxu0
        %458 = vdwg.mxu0
        %v459 = vadd.f32 %v297, %v456
        %460 = vst [vmem:[#allocation2] sm:$0xf] %v459
        %p461 = scmp.eq.s32.totalorder %s24, 2
        // Predicated region
        $region57: #{tpu_custom_call.1} parent=39 // pred_check
          %p462 = pneg %p461
        $region58: #{tpu_custom_call.1} parent=39 // pred_check_branch
          %464 = sbr.rel (%p462) target = $region60
        $region59: #{tpu_custom_call.1} parent=39 // pred_region
          %v465 = vld [vmem:[#allocation2] sm:$0xf]
          %v466 = vld [vmem:[#allocation9] sm:$0xff]
          %v467 = vld [vmem:[#allocation9 + $0x8] sm:$0xff]
          %v468 = vld [vmem:[#allocation9 + $0x10] sm:$0xff]
          %v469 = vld [vmem:[#allocation9 + $0x18] sm:$0xff]
          %v471 = vrot.slane %v465, 1
          %v472 = vrot.slane %v465, 2
          %v473 = vrot.slane %v465, 3
          %v474 = vperm.slane %v465, 0
          %v475 = vperm.slane %v471, 0
          %v476 = vperm.slane %v472, 0
          %v477 = vperm.slane %v473, 0
          %v482 = vmul.f32 %v474, %v466
          %v483 = vmul.f32 %v475, %v467
          %v484 = vmul.f32 %v476, %v468
          %v485 = vmul.f32 %v477, %v469
          %486 = vadd.xlane.f32.xlu0 %v482
          %v487 = vpop.xlane.xlu0 %486
          %488 = vadd.xlane.f32.xlu0 %v483
          %v489 = vpop.xlane.xlu0 %488
          %490 = vadd.xlane.f32.xlu0 %v484
          %v491 = vpop.xlane.xlu0 %490
          %492 = vadd.xlane.f32.xlu0 %v485
          %v493 = vpop.xlane.xlu0 %492
          %v494 = vmul.f32 %v465, %v465
          %vm495 = vcmask 1043456
          %v496 = vsel %vm495, %v494, 0.0
          %497 = vadd.xlane.f32.xlu0 %v496
          %v498 = vpop.xlane.xlu0 %497
          %v499 = vmul.f32 %v466, %v466
          %v500 = vmul.f32 %v467, %v467
          %v501 = vmul.f32 %v468, %v468
          %v502 = vmul.f32 %v469, %v469
          %503 = vadd.xlane.f32.xlu0 %v499
          %v504 = vpop.xlane.xlu0 %503
          %505 = vadd.xlane.f32.xlu0 %v500
          %v506 = vpop.xlane.xlu0 %505
          %507 = vadd.xlane.f32.xlu0 %v501
          %v508 = vpop.xlane.xlu0 %507
          %509 = vadd.xlane.f32.xlu0 %v502
          %v510 = vpop.xlane.xlu0 %509
          %v515 = vlaneseq
          %v516 = vand.u32 %v515, 127
          %v517 = vperm.slane %v504, %v516
          %v518 = vperm.slane %v506, %v516
          %v519 = vperm.slane %v508, %v516
          %v520 = vperm.slane %v510, %v516
          %vm521 = vcmask 1041409
          %v522 = vsel %vm521, %v518, %v517
          %vm523 = vcmask 1042434
          %v524 = vsel %vm523, %v519, %v522
          %vm525 = vcmask 1043459
          %v526 = vsel %vm525, %v520, %v524
          %v528 = vmul.f32 %v498, %v526
          %v529 = vrsqrt.pop %v528
          %v530 = vmul.f32 %v529, %v528
          %v531 = vmul.f32 %v530, %v529
          %v532 = vmul.f32 0.5, %v531
          %v533 = vsub.f32 1.5, %v532
          %v534 = vmul.f32 %v529, %v533
          %vm535 = vweird.f32 %v528
          %vm536 = vweird.f32 %v529
          %vm537 = vmor %vm535, %vm536
          %v538 = vsel %vm537, %v529, %v534
          %v540 = vperm.slane %v538, 0
          %v541 = vlaneseq
          %v542 = vshrl.u32 %v541, 7
          %544 = vset.pattern.permute.xlu0 %v542
          %545 = vperm.xlu0 %544, %v540
          %v546 = vpop.permute.xlu0 %545
          %v547 = vperm.slane %v538, 1
          %v548 = vlaneseq
          %v549 = vshrl.u32 %v548, 7
          %551 = vset.pattern.permute.xlu0 %v549
          %552 = vperm.xlu0 %551, %v547
          %v553 = vpop.permute.xlu0 %552
          %v554 = vperm.slane %v538, 2
          %v555 = vlaneseq
          %v556 = vshrl.u32 %v555, 7
          %558 = vset.pattern.permute.xlu0 %v556
          %559 = vperm.xlu0 %558, %v554
          %v560 = vpop.permute.xlu0 %559
          %v561 = vperm.slane %v538, 3
          %v562 = vlaneseq
          %v563 = vshrl.u32 %v562, 7
          %565 = vset.pattern.permute.xlu0 %v563
          %566 = vperm.xlu0 %565, %v561
          %v567 = vpop.permute.xlu0 %566
          %v572 = vmul.f32 %v487, %v546
          %v573 = vmul.f32 %v489, %v553
          %v574 = vmul.f32 %v491, %v560
          %v575 = vmul.f32 %v493, %v567
          %s576 = sld [smem:[#allocation3]]
          %s577 = sadd.f32 %s576, 1.0
          %v578 = vstv %s577
          %v579 = vsub.f32 %v578, %v572
          %v580 = vsub.f32 %v578, %v573
          %v581 = vsub.f32 %v578, %v574
          %v582 = vsub.f32 %v578, %v575
          %v583 = vlog2.pop %v579
          %v584 = vmul.f32 %v583, 0.6931472
          %v585 = vlog2.pop %v580
          %v586 = vmul.f32 %v585, 0.6931472
          %v587 = vlog2.pop %v581
          %v588 = vmul.f32 %v587, 0.6931472
          %v589 = vlog2.pop %v582
          %v590 = vmul.f32 %v589, 0.6931472
          %v591 = vsub.f32 0.0, %v584
          %v592 = vsub.f32 0.0, %v586
          %v593 = vsub.f32 0.0, %v588
          %v594 = vsub.f32 0.0, %v590
          %599 = vset.pattern.permute.xlu0 0
          %600 = vperm.xlu0 %599, %v591
          %v601 = vpop.permute.xlu0 %600
          %602 = vset.pattern.permute.xlu0 0
          %603 = vperm.xlu0 %602, %v592
          %v604 = vpop.permute.xlu0 %603
          %605 = vset.pattern.permute.xlu0 0
          %606 = vperm.xlu0 %605, %v593
          %v607 = vpop.permute.xlu0 %606
          %608 = vset.pattern.permute.xlu0 0
          %609 = vperm.xlu0 %608, %v594
          %v610 = vpop.permute.xlu0 %609
          %v611 = vperm.slane %v601, %v516
          %v612 = vperm.slane %v604, %v516
          %v613 = vperm.slane %v607, %v516
          %v614 = vperm.slane %v610, %v516
          %v615 = vsel %vm521, %v612, %v611
          %v616 = vsel %vm523, %v613, %v615
          %v617 = vsel %vm525, %v614, %v616
          %vm619 = vcmask 60416
          %v620 = vsel %vm619, %v617, 0.0
          %621 = vadd.xlane.f32.xlu0 %v620
          %v622 = vpop.xlane.xlu0 %621
          %v623 = vld [vmem:[%s3] sm:$0xf]
          %v624 = vmul.f32 %v622, %v623
          %vm625 = vcmask 3072
          %v626 = vsel %vm625, %v624, 0.0
          %627 = vadd.xlane.f32.xlu0 %v626
          %v628 = vpop.xlane.xlu0 %627
          %v629 = vrot.slane %v628, 4
          %v630 = vadd.f32 %v628, %v629
          %v631 = vrot.slane %v630, 2
          %v632 = vadd.f32 %v630, %v631
          %v633 = vrot.slane %v632, 1
          %v634 = vadd.f32 %v632, %v633
          %s635 = vtos %v634
          %v636 = vstv %s635
          %vm637 = vcmask 0
          %638 = vst.msk [vmem:[#allocation10] sm:$0x1] %vm637, %v636
        $region60: #{tpu_custom_call.1} parent=39 // pred_fallthru
          _
        // Predicated region
        $region61: #{tpu_custom_call.1} parent=39 // pred_check
          %p639 = pneg %p152
        $region62: #{tpu_custom_call.1} parent=39 // pred_check_branch
          %641 = sbr.rel (%p639) target = $region64
        $region63: #{tpu_custom_call.1} parent=39 // pred_region
          %643 = vsyncadd [#allocation6], 0
          %s645 = sshll.u32 [#allocation10], 4
          %s646 = int_to_ptr.vmem [resolvable:$true] %s645
          %s647 = sshll.u32 %s5, 4
          %s648 = int_to_ptr.hbm [resolvable:$true] %s647
          %650 = dma.vmem_to_hbm [thread:$0]  %s646, 16, %s648, [#allocation6]
        $region64: #{tpu_custom_call.1} parent=39 // pred_fallthru
          _
        // Predicated region
        $region65: #{tpu_custom_call.1} parent=39 // pred_check
          %p651 = pneg %p152
        $region66: #{tpu_custom_call.1} parent=39 // pred_check_branch
          %653 = sbr.rel (%p651) target = $region68
        $region67: #{tpu_custom_call.1} parent=39 // pred_region
          %655 = dma.done [#allocation6], 16
        $region68: #{tpu_custom_call.1} parent=39 // pred_fallthru
          _
      $region40: #{tpu_custom_call.1} parent=5 // pred_fallthru
        _
      %p656 = scmp.le.s32.totalorder 2, %s19
      // Predicated region
      $region69: #{tpu_custom_call.1} parent=5 // pred_check
        %p657 = pneg %p656
      $region70: #{tpu_custom_call.1} parent=5 // pred_check_branch
        %659 = sbr.rel (%p657) target = $region72
      $region71: #{tpu_custom_call.1} parent=5 // pred_region
        %s660 = ssub.s32 %s19, 2
      $region72: #{tpu_custom_call.1} parent=5 // pred_fallthru
        _
    $region6: #{tpu_custom_call.1} parent=1 // loop_footer
      %s23 = sadd.s32 1, %s19
    $region7: #{tpu_custom_call.1} parent=1 // loop_footer_branch
      %18 = sbr.rel target = $region3
    $region8: #{tpu_custom_call.1} parent=1 // loop_exit
      _
    %661 = vsyncpa [#allocation5], 1
    %s662 = scalar_lea.sflag [#allocation5], 1
    %663 = vsyncpa %s662, 1
    %664 = vsyncpa [#allocation8], 1
    %s665 = scalar_lea.sflag [#allocation8], 1
    %666 = vsyncpa %s665, 1
    %667 = vsyncpa [#allocation6], 1
    %s668 = scalar_lea.sflag [#allocation6], 1
    %669 = vsyncpa %s668, 1

</llo_original>
